<compile_context>
chip_gen: v5e
topology: v5e:2x2
jax: 0.10.0
libtpu: 0.0.40
codegen_flags: <defaults>
</compile_context>

<pallas_src>
import jax
import jax.numpy as jnp
from jax import lax
from jax.experimental import pallas as pl
from jax.experimental.pallas import tpu as pltpu


def _round_up(n, m):
    return ((n + m - 1) // m) * m


def linear_kernel(x_ref, w_ref, b_ref, o_ref):
    # x_ref: (TB, C_in)  w_ref: (C_out, C_in)  b_ref: (1, C_out)  o_ref: (TB, C_out)
    # Contract x's feature dim with the weight's in_features dim (PyTorch layout),
    # i.e. y = x @ W.T, without ever materializing a transposed weight.
    acc = lax.dot_general(
        x_ref[...],
        w_ref[...],
        dimension_numbers=(((1,), (1,)), ((), ())),
        preferred_element_type=jnp.float32,
    )
    o_ref[...] = (acc + b_ref[...].astype(jnp.float32)).astype(o_ref.dtype)


def classifier_forward(x, weight, bias, *, tile_b=None):
    """y = x @ weight.T + bias  (PyTorch nn.Linear semantics).

    x:      (B, C)
    weight: (C, C)   PyTorch layout (out_features, in_features)
    bias:   (C,)
    """
    B, C = x.shape
    assert weight.shape == (C, C)
    assert bias.shape == (C,)
    out_dtype = x.dtype

    # --- pad the feature dim to a lane-dense multiple of 128 ------------------------
    C_pad = _round_up(C, 128)
    if C_pad != C:
        x = jnp.pad(x, ((0, 0), (0, C_pad - C)))
        weight = jnp.pad(weight, ((0, C_pad - C), (0, C_pad - C)))
        bias = jnp.pad(bias, (0, C_pad - C))

    # --- pick the batch tile (multiple of 8 for f32 sublanes, <= 512 rows) ----------
    if tile_b is None:
        tile_b = min(512, _round_up(B, 8))
    tile_b = max(8, _round_up(tile_b, 8))

    B_pad = _round_up(B, tile_b)
    if B_pad != B:
        x = jnp.pad(x, ((0, B_pad - B), (0, 0)))

    b2d = bias.reshape(1, C_pad)
    grid = (B_pad // tile_b,)

    # Raise the scoped-VMEM limit only when the resident weight actually needs it.
    itemsize = jnp.dtype(out_dtype).itemsize
    vmem_est = (
        2 * 2 * tile_b * C_pad * itemsize   # x + out tiles, double-buffered
        + 2 * C_pad * C_pad * itemsize      # resident weight (2 buffers by default)
        + 2 * C_pad * itemsize              # bias row
    )
    compiler_kwargs = dict(dimension_semantics=("parallel",))
    if vmem_est > 24 * 1024 * 1024:
        compiler_kwargs["vmem_limit_bytes"] = int(vmem_est * 1.25)

    out = pl.pallas_call(
        linear_kernel,
        out_shape=jax.ShapeDtypeStruct((B_pad, C_pad), out_dtype),
        grid_spec=pltpu.PrefetchScalarGridSpec(
            num_scalar_prefetch=0,
            grid=grid,
            in_specs=[
                pl.BlockSpec((tile_b, C_pad), lambda i: (i, 0)),  # x tile (streamed)
                pl.BlockSpec((C_pad, C_pad), lambda i: (0, 0)),   # weight (resident)
                pl.BlockSpec((1, C_pad), lambda i: (0, 0)),       # bias row (resident)
            ],
            out_specs=pl.BlockSpec((tile_b, C_pad), lambda i: (i, 0)),
        ),
        compiler_params=pltpu.CompilerParams(**compiler_kwargs),
    )(x, weight, b2d)

    if B_pad != B or C_pad != C:
        out = out[:B, :C]
    return out


if __name__ == "__main__":
    key = jax.random.PRNGKey(0)
    k1, k2 = jax.random.split(key)

    # ---- Case 1: lane/sublane-aligned shapes (no padding path) ---------------------
    B, C = 8, 128
    kx, kw, kb = jax.random.split(k1, 3)
    bound = 1.0 / (C ** 0.5)
    x = jax.random.normal(kx, (B, C), dtype=jnp.float32)
    weight = jax.random.uniform(kw, (C, C), minval=-bound, maxval=bound, dtype=jnp.float32)
    bias = jax.random.uniform(kb, (C,), minval=-bound, maxval=bound, dtype=jnp.float32)

    y = jax.block_until_ready(classifier_forward(x, weight, bias))
    y_ref = x @ weight.T + bias
    assert y.shape == (B, C)
    assert jnp.allclose(y, y_ref, atol=1e-4, rtol=1e-4), "mismatch vs reference (aligned case)"

    # ---- Case 2: ragged shapes exercising the padding path (B=10, C=40 -> 16x128) --
    B2, C2 = 10, 40
    kx2, kw2, kb2 = jax.random.split(k2, 3)
    bound2 = 1.0 / (C2 ** 0.5)
    x2 = jax.random.normal(kx2, (B2, C2), dtype=jnp.float32)
    weight2 = jax.random.uniform(kw2, (C2, C2), minval=-bound2, maxval=bound2, dtype=jnp.float32)
    bias2 = jax.random.uniform(kb2, (C2,), minval=-bound2, maxval=bound2, dtype=jnp.float32)

    y2 = jax.block_until_ready(classifier_forward(x2, weight2, bias2))
    y2_ref = x2 @ weight2.T + bias2
    assert y2.shape == (B2, C2)
    assert jnp.allclose(y2, y2_ref, atol=1e-4, rtol=1e-4), "mismatch vs reference (padded case)"

    print("KERNEL_OK")
</pallas_src>

<mosaic_0001>
module attributes {stable_mosaic.version = 11 : i64} {
  func.func @linear_kernel(%arg0: i32, %arg1: memref<8x128xf32, #tpu.memory_space<vmem>>, %arg2: memref<128x128xf32, #tpu.memory_space<vmem>>, %arg3: memref<1x128xf32, #tpu.memory_space<vmem>>, %arg4: memref<8x128xf32, #tpu.memory_space<vmem>>) attributes {dimension_semantics = [#tpu.dimension_semantics<parallel>], iteration_bounds = array<i64: 1>, scalar_prefetch = 0 : i64, scratch_operands = 0 : i64, tpu.core_type = #tpu.core_type<tc>, window_params = [{transform_indices = @transform_0, window_bounds = array<i64: 8, 128>}, {pipeline_mode = #tpu.pipeline_mode<synchronous>, transform_indices = @transform_1, window_bounds = array<i64: 128, 128>}, {pipeline_mode = #tpu.pipeline_mode<synchronous>, transform_indices = @transform_2, window_bounds = array<i64: 1, 128>}, {transform_indices = @transform_3, window_bounds = array<i64: 8, 128>}]} {
    %c0 = arith.constant 0 : index
    %c0_0 = arith.constant 0 : index
    %0 = vector.load %arg1[%c0, %c0_0] : memref<8x128xf32, #tpu.memory_space<vmem>>, vector<8x128xf32>
    %c0_1 = arith.constant 0 : index
    %c0_2 = arith.constant 0 : index
    %1 = vector.load %arg2[%c0_1, %c0_2] : memref<128x128xf32, #tpu.memory_space<vmem>>, vector<128x128xf32>
    %cst = arith.constant dense<0.000000e+00> : vector<8x128xf32>
    %2 = tpu.matmul %0, %1, %cst {dimension_numbers = #tpu.dot_dimension_numbers<[1], [1], [0], [0], [0, 0, 1, 0], [], []>} : vector<8x128xf32>, vector<128x128xf32>, vector<8x128xf32> -> vector<8x128xf32>
    %c0_3 = arith.constant 0 : index
    %c0_4 = arith.constant 0 : index
    %3 = vector.load %arg3[%c0_3, %c0_4] : memref<1x128xf32, #tpu.memory_space<vmem>>, vector<1x128xf32>
    %4 = vector.broadcast %3 : vector<1x128xf32> to vector<8x128xf32>
    %5 = arith.addf %2, %4 : vector<8x128xf32>
    %c0_5 = arith.constant 0 : index
    %c0_6 = arith.constant 0 : index
    %6 = vector.load %arg4[%c0_5, %c0_6] : memref<8x128xf32, #tpu.memory_space<vmem>>, vector<8x128xf32>
    tpu.vector_store %arg4[%c0_5, %c0_6], %5 {strides = array<i32>} : memref<8x128xf32, #tpu.memory_space<vmem>>, vector<8x128xf32>,
    return
  }
  func.func @transform_0(%arg0: i32) -> (i32, i32) {
    %c0_i32 = arith.constant 0 : i32
    %c0_i32_0 = arith.constant 0 : i32
    return %arg0, %c0_i32 : i32, i32
  }
  func.func @transform_1(%arg0: i32) -> (i32, i32) {
    %c0_i32 = arith.constant 0 : i32
    %c0_i32_0 = arith.constant 0 : i32
    %c0_i32_1 = arith.constant 0 : i32
    return %c0_i32, %c0_i32_0 : i32, i32
  }
  func.func @transform_2(%arg0: i32) -> (i32, i32) {
    %c0_i32 = arith.constant 0 : i32
    %c0_i32_0 = arith.constant 0 : i32
    %c0_i32_1 = arith.constant 0 : i32
    return %c0_i32, %c0_i32_0 : i32, i32
  }
  func.func @transform_3(%arg0: i32) -> (i32, i32) {
    %c0_i32 = arith.constant 0 : i32
    %c0_i32_0 = arith.constant 0 : i32
    return %arg0, %c0_i32 : i32, i32
  }
}

</mosaic_0001>

<llo_original>
// kernel: tpu_custom_call.1
$region0: #{tpu_custom_call.1}
  #allocation0 [shape = 'u32[]', space=smem, size = 0x4, offset = 0x4, fixed_abs, tag = 'smem constant byte address 0x4 - core index']
  #allocation1 [shape = 'u32[72,128]{1,0:T(1,128)}', space=vmem, size = 0x9000, scoped, tag = 'internal scratch']
  %s0 = inlined_call_operand.hbm [shape: f32[8,128], index: 0, kind: input, shape index: {}]
  %s1 = inlined_call_operand.hbm [shape: f32[128,128], index: 1, kind: input, shape index: {}]
  %s2 = inlined_call_operand.vmem [shape: f32[1,128], index: 2, kind: input, shape index: {}]
  %s3 = inlined_call_operand.hbm [shape: f32[8,128], index: 3, kind: output, shape index: {}]
  %s4 = sld [smem:[#allocation0]]
  $region30: #{tpu_custom_call.1} parent=0
    _
  %s6 = ssub.s32 1, %s4
  %s7 = scalar_select 0, %s6, %s4
  $region1: #{tpu_custom_call.1} parent=0
    #allocation2 [shape = 'u8[4096]{0}', space=vmem, size = 0x1000, scoped, tag = 'input window, operand 0, single buffered']
    #allocation3 [shape = 's32[1]{0}', space=sflag, size = 0x4, scoped, tag = 'scoped memory for tpu_custom_call.1']
    #allocation4 [shape = 's32[1]{0}', space=sflag, size = 0x4, scoped, tag = 'scoped memory for tpu_custom_call.1']
    #allocation5 [shape = 'u8[65536]{0}', space=vmem, size = 0x10000, scoped, tag = 'input window, operand 1, single buffered']
    #allocation6 [shape = 's32[1]{0}', space=sflag, size = 0x4, scoped, tag = 'scoped memory for tpu_custom_call.1']
    #allocation7 [shape = 'u8[4096]{0}', space=vmem, size = 0x1000, scoped, tag = 'output window, operand 0, single buffered']
    %8 = vsyncpa [#allocation3], 0
    %9 = vsyncpa [#allocation6], 0
    %10 = vsyncpa [#allocation4], 0
    // Predicated region
    $region2: #{tpu_custom_call.1} parent=1 // pred_check
      _
    $region3: #{tpu_custom_call.1} parent=1 // pred_check_branch
      %12 = sbr.rel (0) target = $region5
    $region4: #{tpu_custom_call.1} parent=1 // pred_region
      %14 = vsyncadd [#allocation3], 0
      %s16 = sshll.u32 %s0, 4
      %s17 = int_to_ptr.hbm [resolvable:$true] %s16
      %s18 = sshll.u32 [#allocation2], 4
      %s19 = int_to_ptr.vmem [resolvable:$true] %s18
      %21 = dma.hbm_to_vmem [thread:$0]  %s17, 128, %s19, [#allocation3]
    $region5: #{tpu_custom_call.1} parent=1 // pred_fallthru
      _
    // Predicated region
    $region6: #{tpu_custom_call.1} parent=1 // pred_check
      _
    $region7: #{tpu_custom_call.1} parent=1 // pred_check_branch
      %23 = sbr.rel (0) target = $region9
    $region8: #{tpu_custom_call.1} parent=1 // pred_region
      %25 = vsyncadd [#allocation6], 0
      %s26 = sshll.u32 %s1, 4
      %s27 = int_to_ptr.hbm [resolvable:$true] %s26
      %s28 = sshll.u32 [#allocation5], 4
      %s29 = int_to_ptr.vmem [resolvable:$true] %s28
      %34 = dma.hbm_to_vmem [thread:$0]  %s27, 2048, %s29, [#allocation6], 128, 128, 8
    $region9: #{tpu_custom_call.1} parent=1 // pred_fallthru
      _
    // Predicated region
    $region10: #{tpu_custom_call.1} parent=1 // pred_check
      _
    $region11: #{tpu_custom_call.1} parent=1 // pred_check_branch
      %36 = sbr.rel (0) target = $region13
    $region12: #{tpu_custom_call.1} parent=1 // pred_region
      _
    $region13: #{tpu_custom_call.1} parent=1 // pred_fallthru
      _
    // Predicated region
    $region14: #{tpu_custom_call.1} parent=1 // pred_check
      _
    $region15: #{tpu_custom_call.1} parent=1 // pred_check_branch
      %38 = sbr.rel (0) target = $region17
    $region16: #{tpu_custom_call.1} parent=1 // pred_region
      %40 = dma.done [#allocation3], 128
    $region17: #{tpu_custom_call.1} parent=1 // pred_fallthru
      _
    // Predicated region
    $region18: #{tpu_custom_call.1} parent=1 // pred_check
      _
    $region19: #{tpu_custom_call.1} parent=1 // pred_check_branch
      %42 = sbr.rel (0) target = $region21
    $region20: #{tpu_custom_call.1} parent=1 // pred_region
      %44 = dma.done [#allocation6], 2048
    $region21: #{tpu_custom_call.1} parent=1 // pred_fallthru
      _
    %v45 = vld [vmem:[#allocation2] sm:$0xff]
    %v46 = vld [vmem:[#allocation5] sm:$0xff]
    %v47 = vld [vmem:[#allocation5 + $0x8] sm:$0xff]
    %v48 = vld [vmem:[#allocation5 + $0x10] sm:$0xff]
    %v49 = vld [vmem:[#allocation5 + $0x18] sm:$0xff]
    %v50 = vld [vmem:[#allocation5 + $0x20] sm:$0xff]
    %v51 = vld [vmem:[#allocation5 + $0x28] sm:$0xff]
    %v52 = vld [vmem:[#allocation5 + $0x30] sm:$0xff]
    %v53 = vld [vmem:[#allocation5 + $0x38] sm:$0xff]
    %v54 = vld [vmem:[#allocation5 + $0x40] sm:$0xff]
    %v55 = vld [vmem:[#allocation5 + $0x48] sm:$0xff]
    %v56 = vld [vmem:[#allocation5 + $0x50] sm:$0xff]
    %v57 = vld [vmem:[#allocation5 + $0x58] sm:$0xff]
    %v58 = vld [vmem:[#allocation5 + $0x60] sm:$0xff]
    %v59 = vld [vmem:[#allocation5 + $0x68] sm:$0xff]
    %v60 = vld [vmem:[#allocation5 + $0x70] sm:$0xff]
    %v61 = vld [vmem:[#allocation5 + $0x78] sm:$0xff]
    %v62 = vld [vmem:[%s2] sm:$0x1]
    %v64 = vperm.slane %v62, 0
    %66 = vmatpush.xpose.msra.mxu0 %v61
    %67 = vmatpush.xpose.msra.mxu0 %v60
    %68 = vmatpush.xpose.msra.mxu0 %v59
    %69 = vmatpush.xpose.msra.mxu0 %v58
    %70 = vmatpush.xpose.msra.mxu0 %v57
    %71 = vmatpush.xpose.msra.mxu0 %v56
    %72 = vmatpush.xpose.msra.mxu0 %v55
    %73 = vmatpush.xpose.msra.mxu0 %v54
    %74 = vmatpush.xpose.msra.mxu0 %v53
    %75 = vmatpush.xpose.msra.mxu0 %v52
    %76 = vmatpush.xpose.msra.mxu0 %v51
    %77 = vmatpush.xpose.msra.mxu0 %v50
    %78 = vmatpush.xpose.msra.mxu0 %v49
    %79 = vmatpush.xpose.msra.mxu0 %v48
    %80 = vmatpush.xpose.msra.mxu0 %v47
    %81 = vmatpush.xpose.msra.mxu0 %v46
    %82 = vmatmul.f32.gmra.mxu0 %v45
    %v83 = vpop.f32.mrf.mxu0
    %v84 = vadd.f32 %v64, %v83
    %85 = vdwg.mxu0
    %86 = vst [vmem:[#allocation7] sm:$0xff] %v84
    // Predicated region
    $region22: #{tpu_custom_call.1} parent=1 // pred_check
      _
    $region23: #{tpu_custom_call.1} parent=1 // pred_check_branch
      %88 = sbr.rel (0) target = $region25
    $region24: #{tpu_custom_call.1} parent=1 // pred_region
      %90 = vsyncadd [#allocation4], 0
      %s92 = sshll.u32 [#allocation7], 4
      %s93 = int_to_ptr.vmem [resolvable:$true] %s92
      %s94 = sshll.u32 %s3, 4
      %s95 = int_to_ptr.hbm [resolvable:$true] %s94
      %97 = dma.vmem_to_hbm [thread:$0]  %s93, 128, %s95, [#allocation4]
    $region25: #{tpu_custom_call.1} parent=1 // pred_fallthru
      _
    // Predicated region
    $region26: #{tpu_custom_call.1} parent=1 // pred_check
      _
    $region27: #{tpu_custom_call.1} parent=1 // pred_check_branch
      %99 = sbr.rel (0) target = $region29
    $region28: #{tpu_custom_call.1} parent=1 // pred_region
      %101 = dma.done [#allocation4], 128
    $region29: #{tpu_custom_call.1} parent=1 // pred_fallthru
      _
    %102 = vsyncpa [#allocation3], 1
    %103 = vsyncpa [#allocation6], 1
    %104 = vsyncpa [#allocation4], 1

</llo_original>
